<compile_context>
chip_gen: v7x
topology: tpu7x:2x2x1
jax: 0.10.0
libtpu: 0.0.40
codegen_flags: <defaults>
</compile_context>

<pallas_src>
import functools

import jax
import jax.numpy as jnp
from jax.experimental import pallas as pl
from jax.experimental.pallas import tpu as pltpu


def _round_up(x, m):
    return (x + m - 1) // m * m


def _pad2(a, rows, cols):
    pr, pc = rows - a.shape[0], cols - a.shape[1]
    if pr == 0 and pc == 0:
        return a
    return jnp.pad(a, ((0, pr), (0, pc)))


def _device_vmem_bytes():
    """Per-core VMEM capacity; conservative (v7x) fallback if the query fails."""
    try:
        info = pltpu.get_tpu_info()
        v = getattr(info, "vmem_capacity_bytes", None)
        if v:
            return int(v)
    except Exception:
        pass
    return 64 << 20


def _const_spec(shape):
    # Constant index_map -> fetched once for the whole grid; single-buffered so the
    # resident weight footprint in VMEM is 1x instead of the default 2x.
    return pl.BlockSpec(shape, lambda i: (0, 0), pipeline_mode=pl.Buffered(1))


def _pick_tile(dim, pref=512):
    for t in (pref, 512, 256, 128):
        if t <= dim and dim % t == 0:
            return t
    return dim  # full (unpadded) dim is exempt from the (8,128) rule


# ----------------------------------------------------------------------------
# Fused path: all weights resident in VMEM, one kernel for the whole MLP.
# ----------------------------------------------------------------------------
def _fused_mlp_kernel(nohid, use_bias, compute_dtype, *refs):
    """refs = (x, w1, [b1], [w2, [b2]], w3, [b3], out) depending on flags."""
    o_ref = refs[-1]
    it = iter(refs[:-1])
    x_ref = next(it)
    w1_ref = next(it)
    b1_ref = next(it) if use_bias else None
    if not nohid:
        w2_ref = next(it)
        b2_ref = next(it) if use_bias else None
    w3_ref = next(it)
    b3_ref = next(it) if use_bias else None

    # In-kernel cast of x (cheap VPU op, hidden under the MXU).
    x = x_ref[...].astype(compute_dtype)

    # fc1 + relu (f32 accumulation); only the compute-dtype copy stays live.
    h = jnp.dot(x, w1_ref[...], preferred_element_type=jnp.float32)
    if use_bias:
        h = h + b1_ref[...]
    h = jnp.maximum(h, 0.0).astype(compute_dtype)

    # optional fc2 + relu
    if not nohid:
        h = jnp.dot(h, w2_ref[...], preferred_element_type=jnp.float32)
        if use_bias:
            h = h + b2_ref[...]
        h = jnp.maximum(h, 0.0).astype(compute_dtype)

    # fc3 (no activation)
    out = jnp.dot(h, w3_ref[...], preferred_element_type=jnp.float32)
    if use_bias:
        out = out + b3_ref[...]
    o_ref[...] = out.astype(o_ref.dtype)


# ----------------------------------------------------------------------------
# Fallback path: per-layer tiled linear (+optional ReLU) with a K-axis accumulator.
# Used when the resident weights would not fit the device VMEM (e.g. v7x 64 MiB).
# ----------------------------------------------------------------------------
def _linear_kernel(use_bias, relu, *refs):
    if use_bias:
        x_ref, w_ref, b_ref, o_ref, acc_ref = refs
    else:
        x_ref, w_ref, o_ref, acc_ref = refs
        b_ref = None
    k = pl.program_id(2)

    @pl.when(k == 0)
    def _():
        acc_ref[...] = jnp.zeros_like(acc_ref)

    acc_ref[...] += jnp.dot(x_ref[...].astype(w_ref.dtype), w_ref[...],
                            preferred_element_type=jnp.float32)

    @pl.when(k == pl.num_programs(2) - 1)
    def _():
        out = acc_ref[...]
        if use_bias:
            out = out + b_ref[...]
        if relu:
            out = jnp.maximum(out, 0.0)
        o_ref[...] = out.astype(o_ref.dtype)


def _tiled_linear(x, w, b, *, relu, out_dtype, block_m):
    M, K = x.shape
    Kw, N = w.shape
    assert K == Kw and M % block_m == 0
    tn = _pick_tile(N)
    tk = _pick_tile(K)
    grid = (M // block_m, N // tn, K // tk)

    args = [x, w]
    in_specs = [pl.BlockSpec((block_m, tk), lambda i, j, k: (i, k)),
                pl.BlockSpec((tk, tn), lambda i, j, k: (k, j))]
    if b is not None:
        args.append(b)
        in_specs.append(pl.BlockSpec((1, tn), lambda i, j, k: (0, j)))

    kernel = functools.partial(_linear_kernel, b is not None, relu)
    return pl.pallas_call(
        kernel,
        out_shape=jax.ShapeDtypeStruct((M, N), out_dtype),
        grid_spec=pltpu.PrefetchScalarGridSpec(
            num_scalar_prefetch=0,
            grid=grid,
            in_specs=in_specs,
            out_specs=pl.BlockSpec((block_m, tn), lambda i, j, k: (i, j)),
            scratch_shapes=[pltpu.VMEM((block_m, tn), jnp.float32)]),
        compiler_params=pltpu.CompilerParams(
            dimension_semantics=("parallel", "parallel", "arbitrary")),
    )(*args)


# ----------------------------------------------------------------------------
# Parameter preparation (run ONCE, outside the hot path) and forward.
# ----------------------------------------------------------------------------
def prepare_params(params, *, nohid, bias, compute_dtype=jnp.bfloat16):
    """Pad lane dims to 128 and cast to compute_dtype once; returns (prepped, meta)."""
    S, H = params["w1"].shape
    O = params["w3"].shape[1]
    Hp = _round_up(H, 128)
    Op = _round_up(O, 128)
    prepped = {
        # S (fc1 contraction dim) stays unpadded: used as a full-array block dim.
        "w1": _pad2(params["w1"], S, Hp).astype(compute_dtype),
        "w3": _pad2(params["w3"], Hp, Op).astype(compute_dtype),
    }
    if not nohid:
        prepped["w2"] = _pad2(params["w2"], Hp, Hp).astype(compute_dtype)
    if bias:
        prepped["b1"] = _pad2(params["b1"], 1, Hp).astype(jnp.float32)
        if not nohid:
            prepped["b2"] = _pad2(params["b2"], 1, Hp).astype(jnp.float32)
        prepped["b3"] = _pad2(params["b3"], 1, Op).astype(jnp.float32)
    meta = dict(S=S, H=H, O=O, Hp=Hp, Op=Op, nohid=nohid, bias=bias,
                compute_dtype=compute_dtype)
    return prepped, meta


def lex_dnn_forward(x, prepped, meta, *, action_size, sample_size, reward_size,
                    block_m=None, force_tiled=False):
    """Pallas implementation of LexDNN.forward.

    x: [B, state_size] float32; prepped/meta from prepare_params().
    returns: [B, action_size, sample_size, reward_size] float32
    """
    B, S = x.shape
    assert S == meta["S"]
    O, Hp, Op = meta["O"], meta["Hp"], meta["Op"]
    nohid, bias = meta["nohid"], meta["bias"]
    compute_dtype = meta["compute_dtype"]
    assert O == action_size * sample_size * reward_size

    dev_vmem = _device_vmem_bytes()
    small_vmem = dev_vmem <= (80 << 20)  # v7x (64 MiB) vs. v5e/v6e (128 MiB)

    # Batch tile: multiple of 16 (bf16 sublane packing). Single grid step unless B
    # exceeds the generation-aware cap; the cap is a multiple of 256, so any
    # multi-step split keeps MXU-native M tiles (and is worth a v7x 2-TC split).
    if block_m is None:
        cap = 512 if small_vmem else 1024
        block_m = min(cap, _round_up(B, 16))
    block_m = max(16, _round_up(block_m, 16))
    Bp = _round_up(B, block_m)
    grid_m = Bp // block_m

    # Batch-only padding; no lane padding, no wrapper-side cast of x.
    xp = x if Bp == B else jnp.pad(x, ((0, Bp - B), (0, 0)))

    # Resident footprint estimate (weights single-buffered -> 1x).
    wsize = jnp.dtype(compute_dtype).itemsize
    resident = (S * Hp + (0 if nohid else Hp * Hp) + Hp * Op) * wsize
    if bias:
        resident += (Hp + (0 if nohid else Hp) + Op) * 4
    io_bytes = 2 * block_m * S * x.dtype.itemsize + 2 * block_m * Op * 4
    scratch = 3 * block_m * Hp * 4
    est = resident + io_bytes + scratch

    weight_budget = max(dev_vmem - (24 << 20), dev_vmem // 2)
    fused_ok = ((not force_tiled)
                and resident <= weight_budget
                and est <= dev_vmem - (8 << 20))

    if fused_ok:
        args = [xp, prepped["w1"]]
        in_specs = [pl.BlockSpec((block_m, S), lambda i: (i, 0)),
                    _const_spec((S, Hp))]
        if bias:
            args.append(prepped["b1"])
            in_specs.append(_const_spec((1, Hp)))
        if not nohid:
            args.append(prepped["w2"])
            in_specs.append(_const_spec((Hp, Hp)))
            if bias:
                args.append(prepped["b2"])
                in_specs.append(_const_spec((1, Hp)))
        args.append(prepped["w3"])
        in_specs.append(_const_spec((Hp, Op)))
        if bias:
            args.append(prepped["b3"])
            in_specs.append(_const_spec((1, Op)))

        vmem_limit = int(min(max(est, 16 << 20), dev_vmem - (8 << 20)))
        kernel = functools.partial(_fused_mlp_kernel, nohid, bias, compute_dtype)

        # TODO(synk): optionally emit bf16 / unpadded-O output when downstream tolerates it.
        out_flat = pl.pallas_call(
            kernel,
            out_shape=jax.ShapeDtypeStruct((Bp, Op), jnp.float32),
            grid_spec=pltpu.PrefetchScalarGridSpec(
                num_scalar_prefetch=0,
                grid=(grid_m,),
                in_specs=in_specs,
                out_specs=pl.BlockSpec((block_m, Op), lambda i: (i, 0)),
            ),
            compiler_params=pltpu.CompilerParams(
                dimension_semantics=(("parallel",) if grid_m > 1 else ("arbitrary",)),
                vmem_limit_bytes=vmem_limit),
        )(*args)
    else:
        # Weights don't fit resident in VMEM (earliest on v7x): per-layer tiled matmuls.
        h = _tiled_linear(xp, prepped["w1"], prepped.get("b1") if bias else None,
                          relu=True, out_dtype=compute_dtype, block_m=block_m)
        if not nohid:
            h = _tiled_linear(h, prepped["w2"], prepped.get("b2") if bias else None,
                              relu=True, out_dtype=compute_dtype, block_m=block_m)
        out_flat = _tiled_linear(h, prepped["w3"], prepped.get("b3") if bias else None,
                                 relu=False, out_dtype=jnp.float32, block_m=block_m)

    # Strip batch/lane padding, then the PyTorch-style .view().
    return out_flat[:B, :O].reshape(-1, action_size, sample_size, reward_size)


# ----------------------------------------------------------------------------
# Init + pure-JAX reference + self-test.
# ----------------------------------------------------------------------------
def init_params(key, state_size, hidden_size, out_size):
    """Deterministic init mimicking PyTorch Linear (uniform +/- 1/sqrt(fan_in))."""
    ks = jax.random.split(key, 6)

    def lin(kw, kb, fan_in, fan_out):
        bound = 1.0 / jnp.sqrt(fan_in)
        w = jax.random.uniform(kw, (fan_in, fan_out), jnp.float32, -bound, bound)
        b = jax.random.uniform(kb, (1, fan_out), jnp.float32, -bound, bound)
        return w, b

    w1, b1 = lin(ks[0], ks[1], state_size, hidden_size)
    w2, b2 = lin(ks[2], ks[3], hidden_size, hidden_size)
    w3, b3 = lin(ks[4], ks[5], hidden_size, out_size)
    return {"w1": w1, "b1": b1, "w2": w2, "b2": b2, "w3": w3, "b3": b3}


def reference_forward(x, p, *, action_size, sample_size, reward_size,
                      nohid=False, bias=True):
    h = x @ p["w1"] + (p["b1"] if bias else 0.0)
    h = jnp.maximum(h, 0.0)
    if not nohid:
        h = h @ p["w2"] + (p["b2"] if bias else 0.0)
        h = jnp.maximum(h, 0.0)
    o = h @ p["w3"] + (p["b3"] if bias else 0.0)
    return o.reshape(-1, action_size, sample_size, reward_size)


if __name__ == "__main__":
    # Small, forward-consistent sizes (toy scale: kernel correctness check only).
    state_size, hidden_size = 16, 32
    action_size, sample_size, reward_size = 4, 2, 3
    out_size = action_size * sample_size * reward_size

    key = jax.random.PRNGKey(0)
    k_x, k_p = jax.random.split(key)
    params = init_params(k_p, state_size, hidden_size, out_size)

    # Config A: full net with bias, B=64 (fused path, batch padded to block_m).
    B = 64
    x = jax.random.normal(k_x, (B, state_size), jnp.float32)
    ref = reference_forward(x, params, action_size=action_size,
                            sample_size=sample_size, reward_size=reward_size,
                            nohid=False, bias=True)

    prepped_bf16, meta_bf16 = prepare_params(params, nohid=False, bias=True,
                                             compute_dtype=jnp.bfloat16)
    out_bf16 = jax.block_until_ready(lex_dnn_forward(
        x, prepped_bf16, meta_bf16, action_size=action_size,
        sample_size=sample_size, reward_size=reward_size))
    assert out_bf16.shape == (B, action_size, sample_size, reward_size)
    assert jnp.allclose(out_bf16, ref, atol=5e-2, rtol=5e-2)

    # Same config, f32 compute: must match tightly (padding is exact).
    prepped_f32, meta_f32 = prepare_params(params, nohid=False, bias=True,
                                           compute_dtype=jnp.float32)
    out_f32 = jax.block_until_ready(lex_dnn_forward(
        x, prepped_f32, meta_f32, action_size=action_size,
        sample_size=sample_size, reward_size=reward_size))
    assert jnp.allclose(out_f32, ref, atol=1e-4, rtol=1e-4)

    # Forced tiled fallback (the non-resident-weight path) must match too.
    out_tiled = jax.block_until_ready(lex_dnn_forward(
        x, prepped_f32, meta_f32, action_size=action_size,
        sample_size=sample_size, reward_size=reward_size, force_tiled=True))
    assert jnp.allclose(out_tiled, ref, atol=1e-4, rtol=1e-4)

    # Config B: nohid=True, bias=False -> exercises the conditional operand path.
    B2 = 8
    x2 = jax.random.normal(jax.random.PRNGKey(1), (B2, state_size), jnp.float32)
    prepped_nb, meta_nb = prepare_params(params, nohid=True, bias=False,
                                         compute_dtype=jnp.bfloat16)
    out2 = jax.block_until_ready(lex_dnn_forward(
        x2, prepped_nb, meta_nb, action_size=action_size,
        sample_size=sample_size, reward_size=reward_size))
    ref2 = reference_forward(x2, params, action_size=action_size,
                             sample_size=sample_size, reward_size=reward_size,
                             nohid=True, bias=False)
    assert out2.shape == (B2, action_size, sample_size, reward_size)
    assert jnp.allclose(out2, ref2, atol=5e-2, rtol=5e-2)

    print("KERNEL_OK")
</pallas_src>

<mosaic_0001>
module attributes {stable_mosaic.version = 11 : i64} {
  func.func @_fused_mlp_kernel(%arg0: i32, %arg1: memref<64x16xf32, #tpu.memory_space<vmem>>, %arg2: memref<16x128xbf16, #tpu.memory_space<vmem>>, %arg3: memref<1x128xf32, #tpu.memory_space<vmem>>, %arg4: memref<128x128xbf16, #tpu.memory_space<vmem>>, %arg5: memref<1x128xf32, #tpu.memory_space<vmem>>, %arg6: memref<128x128xbf16, #tpu.memory_space<vmem>>, %arg7: memref<1x128xf32, #tpu.memory_space<vmem>>, %arg8: memref<64x128xf32, #tpu.memory_space<vmem>>) attributes {dimension_semantics = [#tpu.dimension_semantics<arbitrary>], iteration_bounds = array<i64: 1>, scalar_prefetch = 0 : i64, scratch_operands = 0 : i64, tpu.core_type = #tpu.core_type<tc>, window_params = [{transform_indices = @transform_0, window_bounds = array<i64: 64, 16>}, {pipeline_mode = #tpu.pipeline_mode<synchronous>, transform_indices = @transform_1, window_bounds = array<i64: 16, 128>}, {pipeline_mode = #tpu.pipeline_mode<synchronous>, transform_indices = @transform_2, window_bounds = array<i64: 1, 128>}, {pipeline_mode = #tpu.pipeline_mode<synchronous>, transform_indices = @transform_3, window_bounds = array<i64: 128, 128>}, {pipeline_mode = #tpu.pipeline_mode<synchronous>, transform_indices = @transform_4, window_bounds = array<i64: 1, 128>}, {pipeline_mode = #tpu.pipeline_mode<synchronous>, transform_indices = @transform_5, window_bounds = array<i64: 128, 128>}, {pipeline_mode = #tpu.pipeline_mode<synchronous>, transform_indices = @transform_6, window_bounds = array<i64: 1, 128>}, {transform_indices = @transform_7, window_bounds = array<i64: 64, 128>}]} {
    %c0 = arith.constant 0 : index
    %c0_0 = arith.constant 0 : index
    %0 = vector.load %arg1[%c0, %c0_0] : memref<64x16xf32, #tpu.memory_space<vmem>>, vector<64x16xf32>
    %1 = arith.truncf %0 : vector<64x16xf32> to vector<64x16xbf16>
    %c0_1 = arith.constant 0 : index
    %c0_2 = arith.constant 0 : index
    %2 = vector.load %arg2[%c0_1, %c0_2] : memref<16x128xbf16, #tpu.memory_space<vmem>>, vector<16x128xbf16>
    %cst = arith.constant dense<0.000000e+00> : vector<64x128xf32>
    %3 = tpu.matmul %1, %2, %cst {dimension_numbers = #tpu.dot_dimension_numbers<[1], [0], [0], [1], [0, 0, 1, 1], [], []>} : vector<64x16xbf16>, vector<16x128xbf16>, vector<64x128xf32> -> vector<64x128xf32>
    %c0_3 = arith.constant 0 : index
    %c0_4 = arith.constant 0 : index
    %4 = vector.load %arg3[%c0_3, %c0_4] : memref<1x128xf32, #tpu.memory_space<vmem>>, vector<1x128xf32>
    %5 = vector.broadcast %4 : vector<1x128xf32> to vector<64x128xf32>
    %6 = arith.addf %3, %5 : vector<64x128xf32>
    %cst_5 = arith.constant 0.000000e+00 : f32
    %7 = vector.broadcast %cst_5 : f32 to vector<64x128xf32>
    %8 = arith.maximumf %6, %7 : vector<64x128xf32>
    %9 = arith.truncf %8 : vector<64x128xf32> to vector<64x128xbf16>
    %c0_6 = arith.constant 0 : index
    %c0_7 = arith.constant 0 : index
    %10 = vector.load %arg4[%c0_6, %c0_7] : memref<128x128xbf16, #tpu.memory_space<vmem>>, vector<128x128xbf16>
    %cst_8 = arith.constant dense<0.000000e+00> : vector<64x128xf32>
    %11 = tpu.matmul %9, %10, %cst_8 {dimension_numbers = #tpu.dot_dimension_numbers<[1], [0], [0], [1], [0, 0, 1, 1], [], []>} : vector<64x128xbf16>, vector<128x128xbf16>, vector<64x128xf32> -> vector<64x128xf32>
    %c0_9 = arith.constant 0 : index
    %c0_10 = arith.constant 0 : index
    %12 = vector.load %arg5[%c0_9, %c0_10] : memref<1x128xf32, #tpu.memory_space<vmem>>, vector<1x128xf32>
    %13 = vector.broadcast %12 : vector<1x128xf32> to vector<64x128xf32>
    %14 = arith.addf %11, %13 : vector<64x128xf32>
    %cst_11 = arith.constant 0.000000e+00 : f32
    %15 = vector.broadcast %cst_11 : f32 to vector<64x128xf32>
    %16 = arith.maximumf %14, %15 : vector<64x128xf32>
    %17 = arith.truncf %16 : vector<64x128xf32> to vector<64x128xbf16>
    %c0_12 = arith.constant 0 : index
    %c0_13 = arith.constant 0 : index
    %18 = vector.load %arg6[%c0_12, %c0_13] : memref<128x128xbf16, #tpu.memory_space<vmem>>, vector<128x128xbf16>
    %cst_14 = arith.constant dense<0.000000e+00> : vector<64x128xf32>
    %19 = tpu.matmul %17, %18, %cst_14 {dimension_numbers = #tpu.dot_dimension_numbers<[1], [0], [0], [1], [0, 0, 1, 1], [], []>} : vector<64x128xbf16>, vector<128x128xbf16>, vector<64x128xf32> -> vector<64x128xf32>
    %c0_15 = arith.constant 0 : index
    %c0_16 = arith.constant 0 : index
    %20 = vector.load %arg7[%c0_15, %c0_16] : memref<1x128xf32, #tpu.memory_space<vmem>>, vector<1x128xf32>
    %21 = vector.broadcast %20 : vector<1x128xf32> to vector<64x128xf32>
    %22 = arith.addf %19, %21 : vector<64x128xf32>
    %c0_17 = arith.constant 0 : index
    %c0_18 = arith.constant 0 : index
    %23 = vector.load %arg8[%c0_17, %c0_18] : memref<64x128xf32, #tpu.memory_space<vmem>>, vector<64x128xf32>
    tpu.vector_store %arg8[%c0_17, %c0_18], %22 {strides = array<i32>} : memref<64x128xf32, #tpu.memory_space<vmem>>, vector<64x128xf32>,
    return
  }
  func.func @transform_0(%arg0: i32) -> (i32, i32) {
    %c0_i32 = arith.constant 0 : i32
    %c0_i32_0 = arith.constant 0 : i32
    return %arg0, %c0_i32 : i32, i32
  }
  func.func @transform_1(%arg0: i32) -> (i32, i32) {
    %c0_i32 = arith.constant 0 : i32
    %c0_i32_0 = arith.constant 0 : i32
    %c0_i32_1 = arith.constant 0 : i32
    return %c0_i32, %c0_i32_0 : i32, i32
  }
  func.func @transform_2(%arg0: i32) -> (i32, i32) {
    %c0_i32 = arith.constant 0 : i32
    %c0_i32_0 = arith.constant 0 : i32
    %c0_i32_1 = arith.constant 0 : i32
    return %c0_i32, %c0_i32_0 : i32, i32
  }
  func.func @transform_3(%arg0: i32) -> (i32, i32) {
    %c0_i32 = arith.constant 0 : i32
    %c0_i32_0 = arith.constant 0 : i32
    %c0_i32_1 = arith.constant 0 : i32
    return %c0_i32, %c0_i32_0 : i32, i32
  }
  func.func @transform_4(%arg0: i32) -> (i32, i32) {
    %c0_i32 = arith.constant 0 : i32
    %c0_i32_0 = arith.constant 0 : i32
    %c0_i32_1 = arith.constant 0 : i32
    return %c0_i32, %c0_i32_0 : i32, i32
  }
  func.func @transform_5(%arg0: i32) -> (i32, i32) {
    %c0_i32 = arith.constant 0 : i32
    %c0_i32_0 = arith.constant 0 : i32
    %c0_i32_1 = arith.constant 0 : i32
    return %c0_i32, %c0_i32_0 : i32, i32
  }
  func.func @transform_6(%arg0: i32) -> (i32, i32) {
    %c0_i32 = arith.constant 0 : i32
    %c0_i32_0 = arith.constant 0 : i32
    %c0_i32_1 = arith.constant 0 : i32
    return %c0_i32, %c0_i32_0 : i32, i32
  }
  func.func @transform_7(%arg0: i32) -> (i32, i32) {
    %c0_i32 = arith.constant 0 : i32
    %c0_i32_0 = arith.constant 0 : i32
    return %arg0, %c0_i32 : i32, i32
  }
}

</mosaic_0001>

<llo_original>
// kernel: tpu_custom_call.1
$region0: #{tpu_custom_call.1}
  #allocation0 [shape = 'u32[]', space=smem, size = 0x4, offset = 0x4, fixed_abs, tag = 'smem constant byte address 0x4 - core index']
  #allocation1 [shape = 'u32[144,128]{1,0:T(1,128)}', space=vmem, size = 0x12000, scoped, tag = 'internal scratch']
  %s0 = inlined_call_operand.vmem [shape: f32[64,16], index: 0, kind: input, shape index: {}]
  %s1 = inlined_call_operand.vmem [shape: bf16[16,128], index: 1, kind: input, shape index: {}]
  %s2 = inlined_call_operand.vmem [shape: f32[1,128], index: 2, kind: input, shape index: {}]
  %s3 = inlined_call_operand.vmem [shape: bf16[128,128], index: 3, kind: input, shape index: {}]
  %s4 = inlined_call_operand.vmem [shape: f32[1,128], index: 4, kind: input, shape index: {}]
  %s5 = inlined_call_operand.hbm [shape: bf16[128,128], index: 5, kind: input, shape index: {}]
  %s6 = inlined_call_operand.vmem [shape: f32[1,128], index: 6, kind: input, shape index: {}]
  %s7 = inlined_call_operand.hbm [shape: f32[64,128], index: 7, kind: output, shape index: {}]
  %s8 = sld [smem:[#allocation0]]
  $region42: #{tpu_custom_call.1} parent=0
    _
  %s10 = ssub.s32 1, %s8
  %s11 = scalar_select 0, %s10, %s8
  $region1: #{tpu_custom_call.1} parent=0
    #allocation2 [shape = 'u8[32768]{0}', space=vmem, size = 0x8000, scoped, tag = 'input window, operand 5, single buffered']
    #allocation3 [shape = 's32[1]{0}', space=sflag, size = 0x4, scoped, tag = 'scoped memory for tpu_custom_call.1']
    #allocation4 [shape = 's32[1]{0}', space=sflag, size = 0x4, scoped, tag = 'scoped memory for tpu_custom_call.1']
    #allocation5 [shape = 'u8[32768]{0}', space=vmem, size = 0x8000, scoped, tag = 'output window, operand 0, single buffered']
    %12 = vsyncpa [#allocation3], 0
    %13 = vsyncpa [#allocation4], 0
    // Predicated region
    $region2: #{tpu_custom_call.1} parent=1 // pred_check
      _
    $region3: #{tpu_custom_call.1} parent=1 // pred_check_branch
      %15 = sbr.rel (0) target = $region5
    $region4: #{tpu_custom_call.1} parent=1 // pred_region
      _
    $region5: #{tpu_custom_call.1} parent=1 // pred_fallthru
      _
    // Predicated region
    $region6: #{tpu_custom_call.1} parent=1 // pred_check
      _
    $region7: #{tpu_custom_call.1} parent=1 // pred_check_branch
      %17 = sbr.rel (0) target = $region9
    $region8: #{tpu_custom_call.1} parent=1 // pred_region
      _
    $region9: #{tpu_custom_call.1} parent=1 // pred_fallthru
      _
    // Predicated region
    $region10: #{tpu_custom_call.1} parent=1 // pred_check
      _
    $region11: #{tpu_custom_call.1} parent=1 // pred_check_branch
      %19 = sbr.rel (0) target = $region13
    $region12: #{tpu_custom_call.1} parent=1 // pred_region
      _
    $region13: #{tpu_custom_call.1} parent=1 // pred_fallthru
      _
    // Predicated region
    $region14: #{tpu_custom_call.1} parent=1 // pred_check
      _
    $region15: #{tpu_custom_call.1} parent=1 // pred_check_branch
      %21 = sbr.rel (0) target = $region17
    $region16: #{tpu_custom_call.1} parent=1 // pred_region
      _
    $region17: #{tpu_custom_call.1} parent=1 // pred_fallthru
      _
    // Predicated region
    $region18: #{tpu_custom_call.1} parent=1 // pred_check
      _
    $region19: #{tpu_custom_call.1} parent=1 // pred_check_branch
      %23 = sbr.rel (0) target = $region21
    $region20: #{tpu_custom_call.1} parent=1 // pred_region
      _
    $region21: #{tpu_custom_call.1} parent=1 // pred_fallthru
      _
    // Predicated region
    $region22: #{tpu_custom_call.1} parent=1 // pred_check
      _
    $region23: #{tpu_custom_call.1} parent=1 // pred_check_branch
      %25 = sbr.rel (0) target = $region25
    $region24: #{tpu_custom_call.1} parent=1 // pred_region
      %s27 = ssub.s32 1024, 1024
      %28 = vsyncadd [#allocation3], %s27
      %s29 = sshll.u32 [#allocation2], 4
      %s30 = int_to_ptr.vmem [resolvable:$true] %s29
      %35 = dma.hbm_to_vmem [thread:$0]  %s5, 1024, %s30, [#allocation3], 64, 64, 4
    $region25: #{tpu_custom_call.1} parent=1 // pred_fallthru
      _
    // Predicated region
    $region26: #{tpu_custom_call.1} parent=1 // pred_check
      _
    $region27: #{tpu_custom_call.1} parent=1 // pred_check_branch
      %37 = sbr.rel (0) target = $region29
    $region28: #{tpu_custom_call.1} parent=1 // pred_region
      _
    $region29: #{tpu_custom_call.1} parent=1 // pred_fallthru
      _
    // Predicated region
    $region30: #{tpu_custom_call.1} parent=1 // pred_check
      _
    $region31: #{tpu_custom_call.1} parent=1 // pred_check_branch
      %39 = sbr.rel (0) target = $region33
    $region32: #{tpu_custom_call.1} parent=1 // pred_region
      %40 = dma.done [#allocation3], 1024
    $region33: #{tpu_custom_call.1} parent=1 // pred_fallthru
      _
    %v42 = vld [vmem:[%s0] sm:$0xff]
    %v43 = vld [vmem:[%s0 + $0x8] sm:$0xff]
    %v44 = vld [vmem:[%s0 + $0x10] sm:$0xff]
    %v45 = vld [vmem:[%s0 + $0x18] sm:$0xff]
    %v46 = vld [vmem:[%s0 + $0x20] sm:$0xff]
    %v47 = vld [vmem:[%s0 + $0x28] sm:$0xff]
    %v48 = vld [vmem:[%s0 + $0x30] sm:$0xff]
    %v49 = vld [vmem:[%s0 + $0x38] sm:$0xff]
    %v50 = vpack.c.bf16 %v43, %v42
    %v51 = vpack.c.bf16 %v45, %v44
    %v52 = vpack.c.bf16 %v47, %v46
    %v53 = vpack.c.bf16 %v49, %v48
    %v54 = vld [vmem:[%s1] sm:$0xf]
    %v55 = vld [vmem:[%s1 + $0x4] sm:$0xf]
    %v56 = vld [vmem:[%s2] sm:$0x1]
    %v58 = vlaneseq
    %v59 = vshrl.u32 %v58, 7
    %v60 = vsub.s32 0, %v59
    %v61 = vrot.slane %v56, %v60
    %v65 = vunpack.c.l.b16 %v54
    %v66 = vunpack.c.l.b16 %v55
    %v67 = vpack.c.b16 %v66, %v65
    %vm69 = vcmask 130048
    %v71 = vsel %vm69, %v50, 0
    %v74 = vsel %vm69, %v51, 0
    %v77 = vsel %vm69, %v52, 0
    %v80 = vsel %vm69, %v53, 0
    %82 = vmatprep.subr.bf16.mxu0 0
    %83 = vmatpush1.bf16.msra.mxu0 %v67
    %84 = vmatprep.subr.bf16.mxu0 0
    %85 = vmatpush1.bf16.msra.mxu0 0
    %86 = vmatprep.subr.bf16.mxu0 0
    %87 = vmatpush1.bf16.msra.mxu0 0
    %88 = vmatprep.subr.bf16.mxu0 0
    %89 = vmatpush1.bf16.msra.mxu0 0
    %90 = vmatprep.subr.bf16.mxu0 0
    %91 = vmatpush1.bf16.msra.mxu0 0
    %92 = vmatprep.subr.bf16.mxu0 0
    %93 = vmatpush1.bf16.msra.mxu0 0
    %94 = vmatprep.subr.bf16.mxu0 0
    %95 = vmatpush1.bf16.msra.mxu0 0
    %96 = vmatprep.subr.bf16.mxu0 0
    %97 = vmatpush1.bf16.msra.mxu0 0
    %98 = vmatprep.subr.bf16.mxu0 0
    %99 = vmatpush1.bf16.msra.mxu0 0
    %100 = vmatprep.subr.bf16.mxu0 0
    %101 = vmatpush1.bf16.msra.mxu0 0
    %102 = vmatprep.subr.bf16.mxu0 0
    %103 = vmatpush1.bf16.msra.mxu0 0
    %104 = vmatprep.subr.bf16.mxu0 0
    %105 = vmatpush1.bf16.msra.mxu0 0
    %106 = vmatprep.subr.bf16.mxu0 0
    %107 = vmatpush1.bf16.msra.mxu0 0
    %108 = vmatprep.subr.bf16.mxu0 0
    %109 = vmatpush1.bf16.msra.mxu0 0
    %110 = vmatprep.subr.bf16.mxu0 0
    %111 = vmatpush1.bf16.msra.mxu0 0
    %112 = vmatprep.subr.bf16.mxu0 0
    %113 = vmatpush1.bf16.msra.mxu0 0
    %114 = vmatprep.mubr.bf16.mxu0 0
    %115 = vmatmul.mubr.bf16.gmra.mrb[0].mxu0 %v71
    %v116 = vpop.f32.mrb[0].mxu0
    %v117 = vadd.f32 %v61, %v116
    %v118 = vpop.f32.mrb[0].mxu0
    %v119 = vpop.f32.mrb[0].mxu0
    %v120 = vadd.f32 %v61, %v119
    %v121 = vpop.f32.mrb[0].mxu0
    %122 = vmatprep.mubr.bf16.mxu0 0
    %123 = vmatmul.mubr.bf16.gmra.mrb[0].mxu0 %v74
    %v124 = vpop.f32.mrb[0].mxu0
    %v125 = vadd.f32 %v61, %v124
    %v126 = vpop.f32.mrb[0].mxu0
    %v127 = vpop.f32.mrb[0].mxu0
    %v128 = vadd.f32 %v61, %v127
    %v129 = vpop.f32.mrb[0].mxu0
    %130 = vmatprep.mubr.bf16.mxu0 0
    %131 = vmatmul.mubr.bf16.gmra.mrb[0].mxu0 %v77
    %v132 = vpop.f32.mrb[0].mxu0
    %v133 = vadd.f32 %v61, %v132
    %v134 = vpop.f32.mrb[0].mxu0
    %v135 = vpop.f32.mrb[0].mxu0
    %v136 = vadd.f32 %v61, %v135
    %v137 = vpop.f32.mrb[0].mxu0
    %138 = vmatprep.mubr.bf16.mxu0 0
    %139 = vmatmul.mubr.bf16.gmra.mrb[0].mxu0 %v80
    %v140 = vpop.f32.mrb[0].mxu0
    %v141 = vadd.f32 %v61, %v140
    %v142 = vpop.f32.mrb[0].mxu0
    %v143 = vpop.f32.mrb[0].mxu0
    %v144 = vadd.f32 %v61, %v143
    %v145 = vpop.f32.mrb[0].mxu0
    %146 = vdwg.mxu0
    %v147 = vmax.f32 %v117, 0.0
    %v148 = vmax.f32 %v120, 0.0
    %v149 = vmax.f32 %v125, 0.0
    %v150 = vmax.f32 %v128, 0.0
    %v151 = vmax.f32 %v133, 0.0
    %v152 = vmax.f32 %v136, 0.0
    %v153 = vmax.f32 %v141, 0.0
    %v154 = vmax.f32 %v144, 0.0
    %v155 = vpack.c.bf16 %v148, %v147
    %v156 = vpack.c.bf16 %v150, %v149
    %v157 = vpack.c.bf16 %v152, %v151
    %v158 = vpack.c.bf16 %v154, %v153
    %v159 = vld [vmem:[%s3] sm:$0xf]
    %v160 = vld [vmem:[%s3 + $0x4] sm:$0xf]
    %v161 = vld [vmem:[%s3 + $0x8] sm:$0xf]
    %v162 = vld [vmem:[%s3 + $0xc] sm:$0xf]
    %v163 = vld [vmem:[%s3 + $0x10] sm:$0xf]
    %v164 = vld [vmem:[%s3 + $0x14] sm:$0xf]
    %v165 = vld [vmem:[%s3 + $0x18] sm:$0xf]
    %v166 = vld [vmem:[%s3 + $0x1c] sm:$0xf]
    %v167 = vld [vmem:[%s3 + $0x20] sm:$0xf]
    %v168 = vld [vmem:[%s3 + $0x24] sm:$0xf]
    %v169 = vld [vmem:[%s3 + $0x28] sm:$0xf]
    %v170 = vld [vmem:[%s3 + $0x2c] sm:$0xf]
    %v171 = vld [vmem:[%s3 + $0x30] sm:$0xf]
    %v172 = vld [vmem:[%s3 + $0x34] sm:$0xf]
    %v173 = vld [vmem:[%s3 + $0x38] sm:$0xf]
    %v174 = vld [vmem:[%s3 + $0x3c] sm:$0xf]
    %v175 = vld [vmem:[%s4] sm:$0x1]
    %v177 = vlaneseq
    %v178 = vshrl.u32 %v177, 7
    %v179 = vsub.s32 0, %v178
    %v180 = vrot.slane %v175, %v179
    %v198 = vunpack.c.l.b16 %v159
    %v199 = vunpack.c.l.b16 %v160
    %v200 = vunpack.c.l.b16 %v161
    %v201 = vunpack.c.l.b16 %v162
    %v202 = vunpack.c.l.b16 %v163
    %v203 = vunpack.c.l.b16 %v164
    %v204 = vunpack.c.l.b16 %v165
    %v205 = vunpack.c.l.b16 %v166
    %v206 = vunpack.c.l.b16 %v167
    %v207 = vunpack.c.l.b16 %v168
    %v208 = vunpack.c.l.b16 %v169
    %v209 = vunpack.c.l.b16 %v170
    %v210 = vunpack.c.l.b16 %v171
    %v211 = vunpack.c.l.b16 %v172
    %v212 = vunpack.c.l.b16 %v173
    %v213 = vunpack.c.l.b16 %v174
    %v214 = vpack.c.b16 %v199, %v198
    %v215 = vpack.c.b16 %v201, %v200
    %v216 = vpack.c.b16 %v203, %v202
    %v217 = vpack.c.b16 %v205, %v204
    %v218 = vpack.c.b16 %v207, %v206
    %v219 = vpack.c.b16 %v209, %v208
    %v220 = vpack.c.b16 %v211, %v210
    %v221 = vpack.c.b16 %v213, %v212
    %230 = vmatprep.subr.bf16.mxu0 0
    %231 = vmatpush1.bf16.msra.mxu0 %v214
    %232 = vmatprep.subr.bf16.mxu0 0
    %233 = vmatpush1.bf16.msra.mxu0 %v215
    %234 = vmatprep.subr.bf16.mxu0 0
    %235 = vmatpush1.bf16.msra.mxu0 %v216
    %236 = vmatprep.subr.bf16.mxu0 0
    %237 = vmatpush1.bf16.msra.mxu0 %v217
    %238 = vmatprep.subr.bf16.mxu0 0
    %239 = vmatpush1.bf16.msra.mxu0 %v218
    %240 = vmatprep.subr.bf16.mxu0 0
    %241 = vmatpush1.bf16.msra.mxu0 %v219
    %242 = vmatprep.subr.bf16.mxu0 0
    %243 = vmatpush1.bf16.msra.mxu0 %v220
    %244 = vmatprep.subr.bf16.mxu0 0
    %245 = vmatpush1.bf16.msra.mxu0 %v221
    %246 = vmatprep.subr.bf16.mxu0 0
    %247 = vmatpush1.bf16.msra.mxu0 0
    %248 = vmatprep.subr.bf16.mxu0 0
    %249 = vmatpush1.bf16.msra.mxu0 0
    %250 = vmatprep.subr.bf16.mxu0 0
    %251 = vmatpush1.bf16.msra.mxu0 0
    %252 = vmatprep.subr.bf16.mxu0 0
    %253 = vmatpush1.bf16.msra.mxu0 0
    %254 = vmatprep.subr.bf16.mxu0 0
    %255 = vmatpush1.bf16.msra.mxu0 0
    %256 = vmatprep.subr.bf16.mxu0 0
    %257 = vmatpush1.bf16.msra.mxu0 0
    %258 = vmatprep.subr.bf16.mxu0 0
    %259 = vmatpush1.bf16.msra.mxu0 0
    %260 = vmatprep.subr.bf16.mxu0 0
    %261 = vmatpush1.bf16.msra.mxu0 0
    %262 = vmatprep.mubr.bf16.mxu0 0
    %263 = vmatmul.mubr.bf16.gmra.mrb[0].mxu0 %v155
    %v264 = vpop.f32.mrb[0].mxu0
    %v265 = vadd.f32 %v180, %v264
    %v266 = vpop.f32.mrb[0].mxu0
    %v267 = vpop.f32.mrb[0].mxu0
    %v268 = vadd.f32 %v180, %v267
    %v269 = vpop.f32.mrb[0].mxu0
    %270 = vmatprep.mubr.bf16.mxu0 0
    %271 = vmatmul.mubr.bf16.gmra.mrb[0].mxu0 %v156
    %v272 = vpop.f32.mrb[0].mxu0
    %v273 = vadd.f32 %v180, %v272
    %v274 = vpop.f32.mrb[0].mxu0
    %v275 = vpop.f32.mrb[0].mxu0
    %v276 = vadd.f32 %v180, %v275
    %v277 = vpop.f32.mrb[0].mxu0
    %278 = vmatprep.mubr.bf16.mxu0 0
    %279 = vmatmul.mubr.bf16.gmra.mrb[0].mxu0 %v157
    %v280 = vpop.f32.mrb[0].mxu0
    %v281 = vadd.f32 %v180, %v280
    %v282 = vpop.f32.mrb[0].mxu0
    %v283 = vpop.f32.mrb[0].mxu0
    %v284 = vadd.f32 %v180, %v283
    %v285 = vpop.f32.mrb[0].mxu0
    %286 = vmatprep.mubr.bf16.mxu0 0
    %287 = vmatmul.mubr.bf16.gmra.mrb[0].mxu0 %v158
    %v288 = vpop.f32.mrb[0].mxu0
    %v289 = vadd.f32 %v180, %v288
    %v290 = vpop.f32.mrb[0].mxu0
    %v291 = vpop.f32.mrb[0].mxu0
    %v292 = vadd.f32 %v180, %v291
    %v293 = vpop.f32.mrb[0].mxu0
    %294 = vdwg.mxu0
    %v295 = vmax.f32 %v265, 0.0
    %v296 = vmax.f32 %v268, 0.0
    %v297 = vmax.f32 %v273, 0.0
    %v298 = vmax.f32 %v276, 0.0
    %v299 = vmax.f32 %v281, 0.0
    %v300 = vmax.f32 %v284, 0.0
    %v301 = vmax.f32 %v289, 0.0
    %v302 = vmax.f32 %v292, 0.0
    %v303 = vpack.c.bf16 %v296, %v295
    %v304 = vpack.c.bf16 %v298, %v297
    %v305 = vpack.c.bf16 %v300, %v299
    %v306 = vpack.c.bf16 %v302, %v301
    %v307 = vld [vmem:[#allocation2] sm:$0xf]
    %v308 = vld [vmem:[#allocation2 + $0x4] sm:$0xf]
    %v309 = vld [vmem:[#allocation2 + $0x8] sm:$0xf]
    %v310 = vld [vmem:[#allocation2 + $0xc] sm:$0xf]
    %v311 = vld [vmem:[#allocation2 + $0x10] sm:$0xf]
    %v312 = vld [vmem:[#allocation2 + $0x14] sm:$0xf]
    %v313 = vld [vmem:[#allocation2 + $0x18] sm:$0xf]
    %v314 = vld [vmem:[#allocation2 + $0x1c] sm:$0xf]
    %v315 = vld [vmem:[#allocation2 + $0x20] sm:$0xf]
    %v316 = vld [vmem:[#allocation2 + $0x24] sm:$0xf]
    %v317 = vld [vmem:[#allocation2 + $0x28] sm:$0xf]
    %v318 = vld [vmem:[#allocation2 + $0x2c] sm:$0xf]
    %v319 = vld [vmem:[#allocation2 + $0x30] sm:$0xf]
    %v320 = vld [vmem:[#allocation2 + $0x34] sm:$0xf]
    %v321 = vld [vmem:[#allocation2 + $0x38] sm:$0xf]
    %v322 = vld [vmem:[#allocation2 + $0x3c] sm:$0xf]
    %v323 = vld [vmem:[%s6] sm:$0x1]
    %v325 = vlaneseq
    %v326 = vshrl.u32 %v325, 7
    %v327 = vsub.s32 0, %v326
    %v328 = vrot.slane %v323, %v327
    %v346 = vunpack.c.l.b16 %v307
    %v347 = vunpack.c.l.b16 %v308
    %v348 = vunpack.c.l.b16 %v309
    %v349 = vunpack.c.l.b16 %v310
    %v350 = vunpack.c.l.b16 %v311
    %v351 = vunpack.c.l.b16 %v312
    %v352 = vunpack.c.l.b16 %v313
    %v353 = vunpack.c.l.b16 %v314
    %v354 = vunpack.c.l.b16 %v315
    %v355 = vunpack.c.l.b16 %v316
    %v356 = vunpack.c.l.b16 %v317
    %v357 = vunpack.c.l.b16 %v318
    %v358 = vunpack.c.l.b16 %v319
    %v359 = vunpack.c.l.b16 %v320
    %v360 = vunpack.c.l.b16 %v321
    %v361 = vunpack.c.l.b16 %v322
    %v362 = vpack.c.b16 %v347, %v346
    %v363 = vpack.c.b16 %v349, %v348
    %v364 = vpack.c.b16 %v351, %v350
    %v365 = vpack.c.b16 %v353, %v352
    %v366 = vpack.c.b16 %v355, %v354
    %v367 = vpack.c.b16 %v357, %v356
    %v368 = vpack.c.b16 %v359, %v358
    %v369 = vpack.c.b16 %v361, %v360
    %378 = vmatprep.subr.bf16.mxu0 0
    %379 = vmatpush1.bf16.msra.mxu0 %v362
    %380 = vmatprep.subr.bf16.mxu0 0
    %381 = vmatpush1.bf16.msra.mxu0 %v363
    %382 = vmatprep.subr.bf16.mxu0 0
    %383 = vmatpush1.bf16.msra.mxu0 %v364
    %384 = vmatprep.subr.bf16.mxu0 0
    %385 = vmatpush1.bf16.msra.mxu0 %v365
    %386 = vmatprep.subr.bf16.mxu0 0
    %387 = vmatpush1.bf16.msra.mxu0 %v366
    %388 = vmatprep.subr.bf16.mxu0 0
    %389 = vmatpush1.bf16.msra.mxu0 %v367
    %390 = vmatprep.subr.bf16.mxu0 0
    %391 = vmatpush1.bf16.msra.mxu0 %v368
    %392 = vmatprep.subr.bf16.mxu0 0
    %393 = vmatpush1.bf16.msra.mxu0 %v369
    %394 = vmatprep.subr.bf16.mxu0 0
    %395 = vmatpush1.bf16.msra.mxu0 0
    %396 = vmatprep.subr.bf16.mxu0 0
    %397 = vmatpush1.bf16.msra.mxu0 0
    %398 = vmatprep.subr.bf16.mxu0 0
    %399 = vmatpush1.bf16.msra.mxu0 0
    %400 = vmatprep.subr.bf16.mxu0 0
    %401 = vmatpush1.bf16.msra.mxu0 0
    %402 = vmatprep.subr.bf16.mxu0 0
    %403 = vmatpush1.bf16.msra.mxu0 0
    %404 = vmatprep.subr.bf16.mxu0 0
    %405 = vmatpush1.bf16.msra.mxu0 0
    %406 = vmatprep.subr.bf16.mxu0 0
    %407 = vmatpush1.bf16.msra.mxu0 0
    %408 = vmatprep.subr.bf16.mxu0 0
    %409 = vmatpush1.bf16.msra.mxu0 0
    %410 = vmatprep.mubr.bf16.mxu0 0
    %411 = vmatmul.mubr.bf16.gmra.mrb[0].mxu0 %v303
    %v412 = vpop.f32.mrb[0].mxu0
    %v413 = vadd.f32 %v328, %v412
    %v414 = vpop.f32.mrb[0].mxu0
    %v415 = vpop.f32.mrb[0].mxu0
    %v416 = vadd.f32 %v328, %v415
    %v417 = vpop.f32.mrb[0].mxu0
    %418 = vmatprep.mubr.bf16.mxu0 0
    %419 = vmatmul.mubr.bf16.gmra.mrb[0].mxu0 %v304
    %v420 = vpop.f32.mrb[0].mxu0
    %v421 = vadd.f32 %v328, %v420
    %v422 = vpop.f32.mrb[0].mxu0
    %v423 = vpop.f32.mrb[0].mxu0
    %v424 = vadd.f32 %v328, %v423
    %v425 = vpop.f32.mrb[0].mxu0
    %426 = vmatprep.mubr.bf16.mxu0 0
    %427 = vmatmul.mubr.bf16.gmra.mrb[0].mxu0 %v305
    %v428 = vpop.f32.mrb[0].mxu0
    %v429 = vadd.f32 %v328, %v428
    %v430 = vpop.f32.mrb[0].mxu0
    %v431 = vpop.f32.mrb[0].mxu0
    %v432 = vadd.f32 %v328, %v431
    %v433 = vpop.f32.mrb[0].mxu0
    %434 = vmatprep.mubr.bf16.mxu0 0
    %435 = vmatmul.mubr.bf16.gmra.mrb[0].mxu0 %v306
    %v436 = vpop.f32.mrb[0].mxu0
    %v437 = vadd.f32 %v328, %v436
    %v438 = vpop.f32.mrb[0].mxu0
    %v439 = vpop.f32.mrb[0].mxu0
    %v440 = vadd.f32 %v328, %v439
    %v441 = vpop.f32.mrb[0].mxu0
    %442 = vdwg.mxu0
    %443 = vst [vmem:[#allocation5] sm:$0xff] %v413
    %444 = vst [vmem:[#allocation5 + $0x8] sm:$0xff] %v416
    %445 = vst [vmem:[#allocation5 + $0x10] sm:$0xff] %v421
    %446 = vst [vmem:[#allocation5 + $0x18] sm:$0xff] %v424
    %447 = vst [vmem:[#allocation5 + $0x20] sm:$0xff] %v429
    %448 = vst [vmem:[#allocation5 + $0x28] sm:$0xff] %v432
    %449 = vst [vmem:[#allocation5 + $0x30] sm:$0xff] %v437
    %450 = vst [vmem:[#allocation5 + $0x38] sm:$0xff] %v440
    // Predicated region
    $region34: #{tpu_custom_call.1} parent=1 // pred_check
      _
    $region35: #{tpu_custom_call.1} parent=1 // pred_check_branch
      %452 = sbr.rel (0) target = $region37
    $region36: #{tpu_custom_call.1} parent=1 // pred_region
      %s454 = ssub.s32 1024, 1024
      %455 = vsyncadd [#allocation4], %s454
      %s456 = sshll.u32 [#allocation5], 4
      %s457 = int_to_ptr.vmem [resolvable:$true] %s456
      %462 = dma.vmem_to_hbm [thread:$0]  %s457, 1024, %s7, [#allocation4], 128, 128, 8
    $region37: #{tpu_custom_call.1} parent=1 // pred_fallthru
      _
    // Predicated region
    $region38: #{tpu_custom_call.1} parent=1 // pred_check
      _
    $region39: #{tpu_custom_call.1} parent=1 // pred_check_branch
      %464 = sbr.rel (0) target = $region41
    $region40: #{tpu_custom_call.1} parent=1 // pred_region
      %465 = dma.done [#allocation4], 1024
    $region41: #{tpu_custom_call.1} parent=1 // pred_fallthru
      _
    %466 = vsyncpa [#allocation3], 1
    %467 = vsyncpa [#allocation4], 1

</llo_original>
